<compile_context>
chip_gen: v6e
topology: v6e:2x2x1
jax: 0.10.0
libtpu: 0.0.40
codegen_flags: <defaults>
</compile_context>

<pallas_src>
import jax
import jax.numpy as jnp
from jax import lax
from jax.experimental import pallas as pl
from jax.experimental.pallas import tpu as pltpu

NUM_FTRS = 32      # stands in for GoogleNet's fc.in_features (=1024)
NUM_CLASSES = 2


def _round_up(x, m):
    return ((x + m - 1) // m) * m


def _make_kernel(num_ftrs, true_p, pt, slab, n_tail):
    """Build the fused backbone + 3-way-max + classifier kernel.

    Refs per grid step (b, p):
      x_ref   : [1, 9, pt]   bf16   spatial tile (9 data channels only)
      w_ref   : [3F, 9]      bf16   block-diagonal fused 1x1-conv weights
      b_ref   : [3F, 1]      f32    fused conv biases
      wc_ref  : [F, C]       f32    classifier weight
      bc_ref  : [1, C]       f32    classifier bias
      out_ref : [1, 1, C]    f32
      acc_ref : [3F, slab]   f32    lane-kept GAP partial sums (scratch)
    """
    F = num_ftrs
    inv_p = 1.0 / float(true_p)
    n_slabs = pt // slab

    def kernel(x_ref, w_ref, b_ref, wc_ref, bc_ref, out_ref, acc_ref):
        p_idx = pl.program_id(1)

        @pl.when(p_idx == 0)
        def _init():
            acc_ref[...] = jnp.zeros_like(acc_ref)

        w = w_ref[...]          # [3F, 9] bf16 (resident, tiny)
        bvec = b_ref[...]       # [3F, 1] f32

        # Fused matmul -> bias -> ReLU -> accumulate, one lane slab at a time.
        # The MXU result never round-trips through a full-tile f32 buffer.
        def slab_body(k, carry):
            start = pl.multiple_of(k * slab, slab)
            xk = x_ref[0, :, pl.ds(start, slab)]                 # [9, slab] bf16
            yk = jnp.dot(w, xk, preferred_element_type=jnp.float32)  # [3F, slab] f32
            acc_ref[...] += jnp.maximum(yk + bvec, 0.0)
            return carry

        lax.fori_loop(0, n_slabs, slab_body, 0,
                      unroll=True if n_slabs <= 8 else 4)

        @pl.when(p_idx == pl.num_programs(1) - 1)
        def _finalize():
            # Global average pool: one cross-lane reduce per image.
            s = jnp.sum(acc_ref[...], axis=-1, keepdims=True)    # [3F, 1]
            if n_tail > 0:
                # Zero-padded tail positions contributed ReLU(bias) each.
                s = s - float(n_tail) * jnp.maximum(bvec, 0.0)
            s = s * inv_p
            f1 = s[0:F]
            f2 = s[F:2 * F]
            f3 = s[2 * F:3 * F]
            fm = jnp.maximum(jnp.maximum(f1, f2), f3)            # [F, 1]
            # Tiny classifier: [F,1]*[F,C] -> sum over F -> [1,C].
            logits = jnp.sum(fm * wc_ref[...], axis=0, keepdims=True) + bc_ref[...]
            out_ref[...] = logits[None].astype(out_ref.dtype)    # [1,1,C]

    return kernel


def googlenet_trip_max(x_nchw, params, *, block_p=16384):
    """x_nchw: [B, 9, H, W] float32 -> logits [B, NUM_CLASSES] float32."""
    B, C, H, W = x_nchw.shape
    assert C == 9, "expected a 9-channel input (3 x 3-channel slices)"
    P = H * W

    w1, b1, w2, b2, w3, b3, wc, bc = params
    F = w1.shape[0]
    n_cls = wc.shape[1]

    # --- host-side packing: block-diagonal [3F, 9] conv weight, [3F, 1] bias ---
    wpack = jnp.zeros((3 * F, 9), jnp.float32)
    wpack = wpack.at[0:F, 0:3].set(w1)
    wpack = wpack.at[F:2 * F, 3:6].set(w2)
    wpack = wpack.at[2 * F:3 * F, 6:9].set(w3)
    wpack = wpack.astype(jnp.bfloat16)
    bpack = jnp.concatenate(
        [b1.reshape(F), b2.reshape(F), b3.reshape(F)]).reshape(3 * F, 1)
    bpack = bpack.astype(jnp.float32)

    # --- tile sizing: balance tiles so the ragged tail is minimal ---------------
    n_p = max(1, -(-P // max(block_p, 128)))          # cdiv(P, block_p)
    pt = _round_up(-(-P // n_p), 128)                 # per-tile spatial extent
    p_pad = n_p * pt
    n_tail = p_pad - P
    if pt % 512 == 0:
        slab = 512
    elif pt % 256 == 0:
        slab = 256
    else:
        slab = 128

    # --- wrapper input prep: single bf16 cast, pad only if needed (in bf16) -----
    x_flat = x_nchw.reshape(B, 9, P).astype(jnp.bfloat16)
    if p_pad != P:
        x_flat = jnp.pad(x_flat, ((0, 0), (0, 0), (0, p_pad - P)))

    wc_f32 = wc.astype(jnp.float32)
    bc_f32 = bc.reshape(1, n_cls).astype(jnp.float32)

    kernel = _make_kernel(F, P, pt, slab, n_tail)

    out = pl.pallas_call(
        kernel,
        out_shape=jax.ShapeDtypeStruct((B, 1, n_cls), jnp.float32),
        grid_spec=pltpu.PrefetchScalarGridSpec(
            num_scalar_prefetch=0,
            grid=(B, n_p),
            in_specs=[
                pl.BlockSpec((1, 9, pt), lambda b, p: (b, 0, p)),
                pl.BlockSpec((3 * F, 9), lambda b, p: (0, 0)),
                pl.BlockSpec((3 * F, 1), lambda b, p: (0, 0)),
                pl.BlockSpec((F, n_cls), lambda b, p: (0, 0)),
                pl.BlockSpec((1, n_cls), lambda b, p: (0, 0)),
            ],
            out_specs=pl.BlockSpec((1, 1, n_cls), lambda b, p: (b, 0, 0)),
            scratch_shapes=[pltpu.VMEM((3 * F, slab), jnp.float32)],
        ),
        compiler_params=pltpu.CompilerParams(
            dimension_semantics=("parallel", "arbitrary"),
            vmem_limit_bytes=32 * 1024 * 1024,
        ),
    )(x_flat, wpack, bpack, wc_f32, bc_f32)

    return out.reshape(B, n_cls)


def init_params(key):
    ks = jax.random.split(key, 8)

    def w(k, shape, scale=0.1):
        return (scale * jax.random.normal(k, shape)).astype(jnp.float32)

    w1 = w(ks[0], (NUM_FTRS, 3))
    b1 = w(ks[1], (1, NUM_FTRS))
    w2 = w(ks[2], (NUM_FTRS, 3))
    b2 = w(ks[3], (1, NUM_FTRS))
    w3 = w(ks[4], (NUM_FTRS, 3))
    b3 = w(ks[5], (1, NUM_FTRS))
    wc = w(ks[6], (NUM_FTRS, NUM_CLASSES))
    bc = w(ks[7], (1, NUM_CLASSES))
    return (w1, b1, w2, b2, w3, b3, wc, bc)


def _reference(x_nchw, params):
    """Pure-JAX reference (emulating the kernel's bf16 input/weight rounding)."""
    w1, b1, w2, b2, w3, b3, wc, bc = params

    def bf(a):
        return a.astype(jnp.bfloat16).astype(jnp.float32)

    def feat(w, b, xs):
        y = jnp.einsum("fc,bchw->bfhw", bf(w), bf(xs)) + b.reshape(1, -1, 1, 1)
        y = jnp.maximum(y, 0.0)
        return y.mean(axis=(2, 3))

    f = jnp.maximum(
        jnp.maximum(feat(w1, b1, x_nchw[:, 0:3]), feat(w2, b2, x_nchw[:, 3:6])),
        feat(w3, b3, x_nchw[:, 6:9]))
    return f @ wc + bc


if __name__ == "__main__":
    key = jax.random.PRNGKey(0)
    k_x1, k_x2, k_p = jax.random.split(key, 3)
    params = init_params(k_p)

    # Case 1: whole image in one spatial tile (no padding), default block_p.
    x1 = jax.random.normal(k_x1, (2, 9, 16, 16), dtype=jnp.float32)
    out1 = jax.block_until_ready(googlenet_trip_max(x1, params))
    assert out1.shape == (2, NUM_CLASSES)
    assert out1.dtype == jnp.float32
    ref1 = _reference(x1, params)
    assert jnp.allclose(out1, ref1, atol=2e-2, rtol=2e-2), (out1, ref1)

    # Case 2: several spatial tiles + ragged tail (exercises the multi-step
    # accumulate path and the padded-tail ReLU(bias) correction).
    x2 = jax.random.normal(k_x2, (2, 9, 18, 18), dtype=jnp.float32)
    out2 = jax.block_until_ready(googlenet_trip_max(x2, params, block_p=128))
    ref2 = _reference(x2, params)
    assert jnp.allclose(out2, ref2, atol=2e-2, rtol=2e-2), (out2, ref2)

    print("KERNEL_OK")
</pallas_src>

<mosaic_0001>
module attributes {stable_mosaic.version = 11 : i64} {
  func.func @kernel(%arg0: i32, %arg1: i32, %arg2: memref<1x9x256xbf16, #tpu.memory_space<vmem>>, %arg3: memref<96x9xbf16, #tpu.memory_space<vmem>>, %arg4: memref<96x1xf32, #tpu.memory_space<vmem>>, %arg5: memref<32x2xf32, #tpu.memory_space<vmem>>, %arg6: memref<1x2xf32, #tpu.memory_space<vmem>>, %arg7: memref<1x1x2xf32, #tpu.memory_space<vmem>>, %arg8: memref<96x256xf32, #tpu.memory_space<vmem>>) attributes {dimension_semantics = [#tpu.dimension_semantics<parallel>, #tpu.dimension_semantics<arbitrary>], iteration_bounds = array<i64: 2, 1>, scalar_prefetch = 0 : i64, scratch_operands = 1 : i64, tpu.core_type = #tpu.core_type<tc>, window_params = [{transform_indices = @transform_0, window_bounds = array<i64: 1, 9, 256>}, {pipeline_mode = #tpu.pipeline_mode<synchronous>, transform_indices = @transform_1, window_bounds = array<i64: 96, 9>}, {pipeline_mode = #tpu.pipeline_mode<synchronous>, transform_indices = @transform_2, window_bounds = array<i64: 96, 1>}, {pipeline_mode = #tpu.pipeline_mode<synchronous>, transform_indices = @transform_3, window_bounds = array<i64: 32, 2>}, {pipeline_mode = #tpu.pipeline_mode<synchronous>, transform_indices = @transform_4, window_bounds = array<i64: 1, 2>}, {transform_indices = @transform_5, window_bounds = array<i64: 1, 1, 2>}]} {
    %c0_i32 = arith.constant 0 : i32
    %0 = arith.cmpi eq, %arg1, %c0_i32 : i32
    %1 = arith.extui %0 : i1 to i32
    %c0_i32_0 = arith.constant 0 : i32
    %2 = arith.cmpi ne, %1, %c0_i32_0 : i32
    scf.if %2 {
      %cst_14 = arith.constant 0.000000e+00 : f32
      %21 = vector.broadcast %cst_14 : f32 to vector<96x256xf32>
      %c0_15 = arith.constant 0 : index
      %c0_16 = arith.constant 0 : index
      %22 = vector.load %arg8[%c0_15, %c0_16] : memref<96x256xf32, #tpu.memory_space<vmem>>, vector<96x256xf32>
      tpu.vector_store %arg8[%c0_15, %c0_16], %21 {strides = array<i32>} : memref<96x256xf32, #tpu.memory_space<vmem>>, vector<96x256xf32>,
    } else {
    }
    %c0 = arith.constant 0 : index
    %c0_1 = arith.constant 0 : index
    %3 = vector.load %arg3[%c0, %c0_1] : memref<96x9xbf16, #tpu.memory_space<vmem>>, vector<96x9xbf16>
    %c0_2 = arith.constant 0 : index
    %c0_3 = arith.constant 0 : index
    %4 = vector.load %arg4[%c0_2, %c0_3] : memref<96x1xf32, #tpu.memory_space<vmem>>, vector<96x1xf32>
    %c0_i32_4 = arith.constant 0 : i32
    %c256_i32 = arith.constant 256 : i32
    %5 = arith.muli %c0_i32_4, %c256_i32 : i32
    %6 = tpu.assume_multiple %5, 256 : i32
    %c0_5 = arith.constant 0 : index
    %c0_6 = arith.constant 0 : index
    %7 = arith.index_cast %6 : i32 to index
    %8 = vector.load %arg2[%c0_5, %c0_6, %7] : memref<1x9x256xbf16, #tpu.memory_space<vmem>>, vector<1x9x256xbf16>
    %9 = vector.shape_cast %8 : vector<1x9x256xbf16> to vector<9x256xbf16>
    %cst = arith.constant dense<0.000000e+00> : vector<96x256xf32>
    %10 = tpu.matmul %3, %9, %cst {dimension_numbers = #tpu.dot_dimension_numbers<[1], [0], [0], [1], [0, 0, 1, 1], [], []>} : vector<96x9xbf16>, vector<9x256xbf16>, vector<96x256xf32> -> vector<96x256xf32>
    %c0_7 = arith.constant 0 : index
    %c0_8 = arith.constant 0 : index
    %11 = vector.load %arg8[%c0_7, %c0_8] : memref<96x256xf32, #tpu.memory_space<vmem>>, vector<96x256xf32>
    %12 = vector.broadcast %4 : vector<96x1xf32> to vector<96x256xf32>
    %13 = arith.addf %10, %12 : vector<96x256xf32>
    %cst_9 = arith.constant 0.000000e+00 : f32
    %14 = vector.broadcast %cst_9 : f32 to vector<96x256xf32>
    %15 = arith.maximumf %13, %14 : vector<96x256xf32>
    %16 = arith.addf %11, %15 : vector<96x256xf32>
    %c0_10 = arith.constant 0 : index
    %c0_11 = arith.constant 0 : index
    %17 = vector.load %arg8[%c0_10, %c0_11] : memref<96x256xf32, #tpu.memory_space<vmem>>, vector<96x256xf32>
    tpu.vector_store %arg8[%c0_10, %c0_11], %16 {strides = array<i32>} : memref<96x256xf32, #tpu.memory_space<vmem>>, vector<96x256xf32>,
    %c1_i32 = arith.constant 1 : i32
    %c0_i32_12 = arith.constant 0 : i32
    %18 = arith.cmpi eq, %arg1, %c0_i32_12 : i32
    %19 = arith.extui %18 : i1 to i32
    %c0_i32_13 = arith.constant 0 : i32
    %20 = arith.cmpi ne, %19, %c0_i32_13 : i32
    scf.if %20 {
      %c0_14 = arith.constant 0 : index
      %c0_15 = arith.constant 0 : index
      %21 = vector.load %arg8[%c0_14, %c0_15] : memref<96x256xf32, #tpu.memory_space<vmem>>, vector<96x256xf32>
      %cst_16 = arith.constant dense<0.000000e+00> : vector<96xf32>
      %22 = vector.multi_reduction <add>, %21, %cst_16 [1] : vector<96x256xf32> to vector<96xf32>
      %23 = vector.shape_cast %22 : vector<96xf32> to vector<96x1xf32>
      %cst_17 = arith.constant 3.906250e-03 : f32
      %24 = vector.broadcast %cst_17 : f32 to vector<96x1xf32>
      %25 = arith.mulf %23, %24 : vector<96x1xf32>
      %26 = vector.extract_strided_slice %25 {offsets = [0, 0], sizes = [32, 1], strides = [1, 1]} : vector<96x1xf32> to vector<32x1xf32>
      %27 = vector.extract_strided_slice %25 {offsets = [32, 0], sizes = [32, 1], strides = [1, 1]} : vector<96x1xf32> to vector<32x1xf32>
      %28 = vector.extract_strided_slice %25 {offsets = [64, 0], sizes = [32, 1], strides = [1, 1]} : vector<96x1xf32> to vector<32x1xf32>
      %29 = arith.maximumf %26, %27 : vector<32x1xf32>
      %30 = arith.maximumf %29, %28 : vector<32x1xf32>
      %c0_18 = arith.constant 0 : index
      %c0_19 = arith.constant 0 : index
      %31 = vector.load %arg5[%c0_18, %c0_19] : memref<32x2xf32, #tpu.memory_space<vmem>>, vector<32x2xf32>
      %32 = vector.broadcast %30 : vector<32x1xf32> to vector<32x2xf32>
      %33 = arith.mulf %32, %31 : vector<32x2xf32>
      %cst_20 = arith.constant dense<0.000000e+00> : vector<2xf32>
      %34 = vector.multi_reduction <add>, %33, %cst_20 [0] : vector<32x2xf32> to vector<2xf32>
      %35 = vector.shape_cast %34 : vector<2xf32> to vector<1x2xf32>
      %c0_21 = arith.constant 0 : index
      %c0_22 = arith.constant 0 : index
      %36 = vector.load %arg6[%c0_21, %c0_22] : memref<1x2xf32, #tpu.memory_space<vmem>>, vector<1x2xf32>
      %37 = arith.addf %35, %36 : vector<1x2xf32>
      %38 = vector.shape_cast %37 : vector<1x2xf32> to vector<1x1x2xf32>
      %c0_23 = arith.constant 0 : index
      %c0_24 = arith.constant 0 : index
      %c0_25 = arith.constant 0 : index
      %39 = vector.load %arg7[%c0_23, %c0_24, %c0_25] : memref<1x1x2xf32, #tpu.memory_space<vmem>>, vector<1x1x2xf32>
      tpu.vector_store %arg7[%c0_23, %c0_24, %c0_25], %38 {strides = array<i32>} : memref<1x1x2xf32, #tpu.memory_space<vmem>>, vector<1x1x2xf32>,
    } else {
    }
    return
  }
  func.func @transform_0(%arg0: i32, %arg1: i32) -> (i32, i32, i32) {
    %c0_i32 = arith.constant 0 : i32
    %c0_i32_0 = arith.constant 0 : i32
    return %arg0, %c0_i32, %arg1 : i32, i32, i32
  }
  func.func @transform_1(%arg0: i32, %arg1: i32) -> (i32, i32) {
    %c0_i32 = arith.constant 0 : i32
    %c0_i32_0 = arith.constant 0 : i32
    %c0_i32_1 = arith.constant 0 : i32
    return %c0_i32, %c0_i32_0 : i32, i32
  }
  func.func @transform_2(%arg0: i32, %arg1: i32) -> (i32, i32) {
    %c0_i32 = arith.constant 0 : i32
    %c0_i32_0 = arith.constant 0 : i32
    %c0_i32_1 = arith.constant 0 : i32
    return %c0_i32, %c0_i32_0 : i32, i32
  }
  func.func @transform_3(%arg0: i32, %arg1: i32) -> (i32, i32) {
    %c0_i32 = arith.constant 0 : i32
    %c0_i32_0 = arith.constant 0 : i32
    %c0_i32_1 = arith.constant 0 : i32
    return %c0_i32, %c0_i32_0 : i32, i32
  }
  func.func @transform_4(%arg0: i32, %arg1: i32) -> (i32, i32) {
    %c0_i32 = arith.constant 0 : i32
    %c0_i32_0 = arith.constant 0 : i32
    %c0_i32_1 = arith.constant 0 : i32
    return %c0_i32, %c0_i32_0 : i32, i32
  }
  func.func @transform_5(%arg0: i32, %arg1: i32) -> (i32, i32, i32) {
    %c0_i32 = arith.constant 0 : i32
    %c0_i32_0 = arith.constant 0 : i32
    %c0_i32_1 = arith.constant 0 : i32
    return %arg0, %c0_i32, %c0_i32_0 : i32, i32, i32
  }
}

</mosaic_0001>

<llo_original>
// kernel: tpu_custom_call.1
$region0: #{tpu_custom_call.1}
  #allocation0 [shape = 'u32[]', space=smem, size = 0x4, offset = 0x4, fixed_abs, tag = 'smem constant byte address 0x4 - core index']
  #allocation1 [shape = 'u32[144,128]{1,0:T(1,128)}', space=vmem, size = 0x12000, scoped, tag = 'internal scratch']
  #allocation2 [shape = 'f32[96,256]{1,0:T(8,128)}', space=vmem, size = 0x18000, scoped, tag = 'scratch operand']
  %s0 = inlined_call_operand.vmem [shape: bf16[2,9,256], index: 0, kind: input, shape index: {}]
  %s1 = inlined_call_operand.vmem [shape: bf16[96,9], index: 1, kind: input, shape index: {}]
  %s2 = inlined_call_operand.vmem [shape: f32[96,1], index: 2, kind: input, shape index: {}]
  %s3 = inlined_call_operand.vmem [shape: f32[32,2], index: 3, kind: input, shape index: {}]
  %s4 = inlined_call_operand.vmem [shape: f32[1,2], index: 4, kind: input, shape index: {}]
  %s5 = inlined_call_operand.hbm [shape: f32[2,1,2], index: 5, kind: output, shape index: {}]
  %s6 = sld [smem:[#allocation0]]
  $region61: #{tpu_custom_call.1} parent=0
    _
  %s8 = ssub.s32 1, %s6
  %s9 = scalar_select 0, %s8, %s6
  $region1: #{tpu_custom_call.1} parent=0
    #allocation3 [shape = 'u8[1024]{0}', space=vmem, size = 0x400, scoped, tag = 'output window, operand 0']
    #allocation4 [shape = 's32[2]{0}', space=sflag, size = 0x8, scoped, tag = 'scoped memory for tpu_custom_call.1']
    %10 = vsyncpa [#allocation4], 0
    %s11 = scalar_lea.sflag [#allocation4], 1
    %12 = vsyncpa %s11, 0
    loop: start=0, step=1, limit=4
    $region2: #{tpu_custom_call.1} parent=1 // loop_pre_header
      _
    $region3: #{tpu_custom_call.1} parent=1 // loop_header
      %s14 = sphi 0, %s18
      %p15 = scmp.ge.s32.totalorder %s14, 4
      %s21 = sphi 0, %s33
      %s22 = sphi 0, %s29
      %s23 = sphi 0, %s21
      %s24 = sphi 0, %s22
      %s25 = sphi 0, %s23
      %s26 = sphi 0, %s24
      %s38 = sphi 0, %s40
      %s41 = sphi 0, %s38
      %s42 = sphi 0, %s41
      %s58 = sphi 0, %s42
      %s62 = sphi 0, %s62
      %s64 = sphi 0, %s62
      %s65 = sphi 0, %s64
      %s79 = sphi 0, %s65
      %s83 = sphi 0, %s83
      %s85 = sphi 0, %s83
      %s86 = sphi 0, %s85
      %s100 = sphi 0, %s86
      %s104 = sphi 0, %s104
      %s106 = sphi 0, %s104
      %s107 = sphi 0, %s106
      %s121 = sphi 0, %s107
      %s125 = sphi 0, %s125
      %s127 = sphi 0, %s125
      %s128 = sphi 0, %s127
      %s142 = sphi 0, %s128
      %s148 = sphi 0, %s150
      %s151 = sphi 0, %s148
      %s152 = sphi 0, %s151
      %s168 = sphi 0, %s152
    $region4: #{tpu_custom_call.1} parent=1 // loop_header_branch
      %17 = sbr.rel (%p15) target = $region8
    $region5: #{tpu_custom_call.1} parent=1 // loop_body
      %s19 = ssub.s32 %s14, 1
      %s20 = ssub.s32 %s14, 2
      %s27 = sadd.s32 1, %s22
      %p28 = scmp.ge.s32.totalorder %s27, 1
      %s29 = scalar_select %p28, 0, %s27
      %s30 = sadd.s32 1, %s21
      %s31 = scalar_select %p28, %s30, %s21
      %p32 = scmp.ge.s32.totalorder %s31, 2
      %s33 = scalar_select %p32, 0, %s31
      %s34 = ssub.s32 %s21, %s33
      %s35 = ssub.s32 %s22, %s29
      %s36 = sor.u32 %s34, %s35
      %p37 = scmp.eq.s32.totalorder %s36, 0
      %s39 = sadd.s32 %s38, 1
      %s40 = scalar_select %p37, %s38, %s39
      %p43 = pneg %p37
      %p44 = scmp.eq.s32.totalorder %s14, 1
      %p45 = por %p43, %p44
      %p46 = scmp.ne.s32.totalorder %s38, %s41
      %p47 = scmp.eq.s32.totalorder %s14, 0
      %p48 = por %p46, %p47
      %p49 = scmp.ne.s32.totalorder %s38, %s41
      %p50 = scmp.eq.s32.totalorder %s19, 1
      %p51 = por %p49, %p50
      %p52 = scmp.ne.s32.totalorder %s41, %s42
      %p53 = scmp.eq.s32.totalorder %s19, 0
      %p54 = por %p52, %p53
      %p55 = scmp.ne.s32.totalorder %s41, %s42
      %p56 = scmp.eq.s32.totalorder %s20, 1
      %p57 = por %p55, %p56
      %p59 = scmp.ne.s32.totalorder %s42, %s58
      %p60 = scmp.eq.s32.totalorder %s20, 0
      %p61 = por %p59, %p60
      %s63 = sadd.s32 %s62, 1
      %p66 = scmp.eq.s32.totalorder %s14, 1
      %p67 = scmp.ne.s32.totalorder %s62, %s64
      %p68 = scmp.eq.s32.totalorder %s14, 0
      %p69 = por %p67, %p68
      %p70 = scmp.ne.s32.totalorder %s62, %s64
      %p71 = scmp.eq.s32.totalorder %s19, 1
      %p72 = por %p70, %p71
      %p73 = scmp.ne.s32.totalorder %s64, %s65
      %p74 = scmp.eq.s32.totalorder %s19, 0
      %p75 = por %p73, %p74
      %p76 = scmp.ne.s32.totalorder %s64, %s65
      %p77 = scmp.eq.s32.totalorder %s20, 1
      %p78 = por %p76, %p77
      %p80 = scmp.ne.s32.totalorder %s65, %s79
      %p81 = scmp.eq.s32.totalorder %s20, 0
      %p82 = por %p80, %p81
      %s84 = sadd.s32 %s83, 1
      %p87 = scmp.eq.s32.totalorder %s14, 1
      %p88 = scmp.ne.s32.totalorder %s83, %s85
      %p89 = scmp.eq.s32.totalorder %s14, 0
      %p90 = por %p88, %p89
      %p91 = scmp.ne.s32.totalorder %s83, %s85
      %p92 = scmp.eq.s32.totalorder %s19, 1
      %p93 = por %p91, %p92
      %p94 = scmp.ne.s32.totalorder %s85, %s86
      %p95 = scmp.eq.s32.totalorder %s19, 0
      %p96 = por %p94, %p95
      %p97 = scmp.ne.s32.totalorder %s85, %s86
      %p98 = scmp.eq.s32.totalorder %s20, 1
      %p99 = por %p97, %p98
      %p101 = scmp.ne.s32.totalorder %s86, %s100
      %p102 = scmp.eq.s32.totalorder %s20, 0
      %p103 = por %p101, %p102
      %s105 = sadd.s32 %s104, 1
      %p108 = scmp.eq.s32.totalorder %s14, 1
      %p109 = scmp.ne.s32.totalorder %s104, %s106
      %p110 = scmp.eq.s32.totalorder %s14, 0
      %p111 = por %p109, %p110
      %p112 = scmp.ne.s32.totalorder %s104, %s106
      %p113 = scmp.eq.s32.totalorder %s19, 1
      %p114 = por %p112, %p113
      %p115 = scmp.ne.s32.totalorder %s106, %s107
      %p116 = scmp.eq.s32.totalorder %s19, 0
      %p117 = por %p115, %p116
      %p118 = scmp.ne.s32.totalorder %s106, %s107
      %p119 = scmp.eq.s32.totalorder %s20, 1
      %p120 = por %p118, %p119
      %p122 = scmp.ne.s32.totalorder %s107, %s121
      %p123 = scmp.eq.s32.totalorder %s20, 0
      %p124 = por %p122, %p123
      %s126 = sadd.s32 %s125, 1
      %p129 = scmp.eq.s32.totalorder %s14, 1
      %p130 = scmp.ne.s32.totalorder %s125, %s127
      %p131 = scmp.eq.s32.totalorder %s14, 0
      %p132 = por %p130, %p131
      %p133 = scmp.ne.s32.totalorder %s125, %s127
      %p134 = scmp.eq.s32.totalorder %s19, 1
      %p135 = por %p133, %p134
      %p136 = scmp.ne.s32.totalorder %s127, %s128
      %p137 = scmp.eq.s32.totalorder %s19, 0
      %p138 = por %p136, %p137
      %p139 = scmp.ne.s32.totalorder %s127, %s128
      %p140 = scmp.eq.s32.totalorder %s20, 1
      %p141 = por %p139, %p140
      %p143 = scmp.ne.s32.totalorder %s128, %s142
      %p144 = scmp.eq.s32.totalorder %s20, 0
      %p145 = por %p143, %p144
      %s146 = ssub.s32 %s21, %s33
      %p147 = scmp.eq.s32.totalorder %s146, 0
      %s149 = sadd.s32 %s148, 1
      %s150 = scalar_select %p147, %s148, %s149
      %p153 = pneg %p147
      %p154 = scmp.eq.s32.totalorder %s14, 1
      %p155 = por %p153, %p154
      %p156 = scmp.ne.s32.totalorder %s148, %s151
      %p157 = scmp.eq.s32.totalorder %s14, 0
      %p158 = por %p156, %p157
      %p159 = scmp.ne.s32.totalorder %s148, %s151
      %p160 = scmp.eq.s32.totalorder %s19, 1
      %p161 = por %p159, %p160
      %p162 = scmp.ne.s32.totalorder %s151, %s152
      %p163 = scmp.eq.s32.totalorder %s19, 0
      %p164 = por %p162, %p163
      %p165 = scmp.ne.s32.totalorder %s151, %s152
      %p166 = scmp.eq.s32.totalorder %s20, 1
      %p167 = por %p165, %p166
      %p169 = scmp.ne.s32.totalorder %s152, %s168
      %p170 = scmp.eq.s32.totalorder %s20, 0
      %p171 = por %p169, %p170
      %p172 = scmp.le.s32.totalorder 1, %s14
      %p173 = scmp.lt.s32.totalorder %s14, 3
      %p174 = pnand %p172, %p173
      %p175 = pneg %p174
      // Predicated region
      $region9: #{tpu_custom_call.1} parent=5 // pred_check
        _
      $region10: #{tpu_custom_call.1} parent=5 // pred_check_branch
        %177 = sbr.rel (%p174) target = $region12
      $region11: #{tpu_custom_call.1} parent=5 // pred_region
        %s178 = ssub.s32 %s14, 1
        // Predicated region
        $region13: #{tpu_custom_call.1} parent=11 // pred_check
          %p179 = pneg %p75
        $region14: #{tpu_custom_call.1} parent=11 // pred_check_branch
          %181 = sbr.rel (%p179) target = $region16
        $region15: #{tpu_custom_call.1} parent=11 // pred_region
          _
        $region16: #{tpu_custom_call.1} parent=11 // pred_fallthru
          _
        // Predicated region
        $region17: #{tpu_custom_call.1} parent=11 // pred_check
          %p182 = pneg %p96
        $region18: #{tpu_custom_call.1} parent=11 // pred_check_branch
          %184 = sbr.rel (%p182) target = $region20
        $region19: #{tpu_custom_call.1} parent=11 // pred_region
          _
        $region20: #{tpu_custom_call.1} parent=11 // pred_fallthru
          _
        // Predicated region
        $region21: #{tpu_custom_call.1} parent=11 // pred_check
          %p185 = pneg %p117
        $region22: #{tpu_custom_call.1} parent=11 // pred_check_branch
          %187 = sbr.rel (%p185) target = $region24
        $region23: #{tpu_custom_call.1} parent=11 // pred_region
          _
        $region24: #{tpu_custom_call.1} parent=11 // pred_fallthru
          _
        // Predicated region
        $region25: #{tpu_custom_call.1} parent=11 // pred_check
          %p188 = pneg %p138
        $region26: #{tpu_custom_call.1} parent=11 // pred_check_branch
          %190 = sbr.rel (%p188) target = $region28
        $region27: #{tpu_custom_call.1} parent=11 // pred_region
          _
        $region28: #{tpu_custom_call.1} parent=11 // pred_fallthru
          _
      $region12: #{tpu_custom_call.1} parent=5 // pred_fallthru
        _
      %p191 = scmp.lt.s32.totalorder %s14, 2
      // Predicated region
      $region29: #{tpu_custom_call.1} parent=5 // pred_check
        %p192 = pneg %p191
      $region30: #{tpu_custom_call.1} parent=5 // pred_check_branch
        %194 = sbr.rel (%p192) target = $region32
      $region31: #{tpu_custom_call.1} parent=5 // pred_region
        // Predicated region
        $region33: #{tpu_custom_call.1} parent=31 // pred_check
          %p195 = pneg %p48
        $region34: #{tpu_custom_call.1} parent=31 // pred_check_branch
          %197 = sbr.rel (%p195) target = $region36
        $region35: #{tpu_custom_call.1} parent=31 // pred_region
          %s198 = smul.u32 2, %s22
          %p199 = scmp.lt.s32.totalorder %s21, 1
          %s200 = scalar_select %p199, %s21, 1
          %p201 = scmp.lt.s32.totalorder %s198, 1
          %s202 = scalar_select %p201, %s198, 1
          %s203 = smul.addr %s200, 4
          %s204 = sadd.s32 %s202, %s203
          %s205 = smul.addr %s204, 4
          %s206 = scalar_lea.vmem %s0, %s205
          %s207 = smul.u32 2, %s22
        $region36: #{tpu_custom_call.1} parent=31 // pred_fallthru
          _
      $region32: #{tpu_custom_call.1} parent=5 // pred_fallthru
        _
      %p208 = scmp.le.s32.totalorder 1, %s14
      %p209 = scmp.lt.s32.totalorder %s14, 3
      %p210 = pnand %p208, %p209
      %p211 = pneg %p210
      // Predicated region
      $region37: #{tpu_custom_call.1} parent=5 // pred_check
        _
      $region38: #{tpu_custom_call.1} parent=5 // pred_check_branch
        %213 = sbr.rel (%p210) target = $region40
      $region39: #{tpu_custom_call.1} parent=5 // pred_region
        %s214 = ssub.s32 %s14, 1
        %s215 = smul.u32 2, %s24
        %p216 = scmp.lt.s32.totalorder %s23, 1
        %s217 = scalar_select %p216, %s23, 1
        %p218 = scmp.lt.s32.totalorder %s215, 1
        %s219 = scalar_select %p218, %s215, 1
        %s220 = smul.addr %s217, 4
        %s221 = sadd.s32 %s219, %s220
        %s222 = smul.addr %s221, 4
        %s223 = scalar_lea.vmem %s0, %s222
        %p224 = pneg %p54
        %p225 = pneg %p51
        %p226 = pneg %p75
        %p227 = pneg %p72
        %p228 = pneg %p96
        %p229 = pneg %p93
        %p230 = pneg %p117
        %p231 = pneg %p114
        %p232 = pneg %p138
        %p233 = pneg %p135
        %p234 = pneg %p164
        %p235 = pneg %p161
        %s236 = sand.u32 %s151, 1
        %s237 = scalar_lea.sflag [#allocation4], %s236
        %s238 = sand.u32 %s151, 1
        %s239 = scalar_lea.vmem [#allocation3], %s238
        %s240 = smul.u32 2, %s24
        %p241 = scmp.lt.s32.totalorder %s23, 1
        %s242 = scalar_select %p241, %s23, 1
        %p243 = scmp.lt.s32.totalorder %s240, 1
        %s244 = scalar_select %p243, %s240, 1
        %s245 = smul.addr %s242, 4
        %s246 = sadd.s32 %s244, %s245
        %s247 = smul.addr %s246, 4
        %s248 = scalar_lea.vmem %s0, %s247
        %s249 = smul.u32 2, %s24
        %p251 = scmp.eq.s32.totalorder %s24, 0
        // Predicated region
        $region41: #{tpu_custom_call.1} parent=39 // pred_check
          %p252 = pneg %p251
        $region42: #{tpu_custom_call.1} parent=39 // pred_check_branch
          %254 = sbr.rel (%p252) target = $region44
        $region43: #{tpu_custom_call.1} parent=39 // pred_region
          %255 = vst [vmem:[#allocation2] sm:$0xff] 0.0
          %256 = vst [vmem:[#allocation2 + $0x8] sm:$0xff] 0.0
          %257 = vst [vmem:[#allocation2 + $0x10] sm:$0xff] 0.0
          %258 = vst [vmem:[#allocation2 + $0x18] sm:$0xff] 0.0
          %259 = vst [vmem:[#allocation2 + $0x20] sm:$0xff] 0.0
          %260 = vst [vmem:[#allocation2 + $0x28] sm:$0xff] 0.0
          %261 = vst [vmem:[#allocation2 + $0x30] sm:$0xff] 0.0
          %262 = vst [vmem:[#allocation2 + $0x38] sm:$0xff] 0.0
          %263 = vst [vmem:[#allocation2 + $0x40] sm:$0xff] 0.0
          %264 = vst [vmem:[#allocation2 + $0x48] sm:$0xff] 0.0
          %265 = vst [vmem:[#allocation2 + $0x50] sm:$0xff] 0.0
          %266 = vst [vmem:[#allocation2 + $0x58] sm:$0xff] 0.0
          %267 = vst [vmem:[#allocation2 + $0x60] sm:$0xff] 0.0
          %268 = vst [vmem:[#allocation2 + $0x68] sm:$0xff] 0.0
          %269 = vst [vmem:[#allocation2 + $0x70] sm:$0xff] 0.0
          %270 = vst [vmem:[#allocation2 + $0x78] sm:$0xff] 0.0
          %271 = vst [vmem:[#allocation2 + $0x80] sm:$0xff] 0.0
          %272 = vst [vmem:[#allocation2 + $0x88] sm:$0xff] 0.0
          %273 = vst [vmem:[#allocation2 + $0x90] sm:$0xff] 0.0
          %274 = vst [vmem:[#allocation2 + $0x98] sm:$0xff] 0.0
          %275 = vst [vmem:[#allocation2 + $0xa0] sm:$0xff] 0.0
          %276 = vst [vmem:[#allocation2 + $0xa8] sm:$0xff] 0.0
          %277 = vst [vmem:[#allocation2 + $0xb0] sm:$0xff] 0.0
          %278 = vst [vmem:[#allocation2 + $0xb8] sm:$0xff] 0.0
        $region44: #{tpu_custom_call.1} parent=39 // pred_fallthru
          _
        %v279 = vld [vmem:[%s1] sm:$0xf]
        %v280 = vld [vmem:[%s1 + $0x4] sm:$0xf]
        %v281 = vld [vmem:[%s1 + $0x8] sm:$0xf]
        %v282 = vld [vmem:[%s1 + $0xc] sm:$0xf]
        %v283 = vld [vmem:[%s1 + $0x10] sm:$0xf]
        %v284 = vld [vmem:[%s1 + $0x14] sm:$0xf]
        %v285 = vld [vmem:[%s1 + $0x18] sm:$0xf]
        %v286 = vld [vmem:[%s1 + $0x1c] sm:$0xf]
        %v287 = vld [vmem:[%s1 + $0x20] sm:$0xf]
        %v288 = vld [vmem:[%s1 + $0x24] sm:$0xf]
        %v289 = vld [vmem:[%s1 + $0x28] sm:$0xf]
        %v290 = vld [vmem:[%s1 + $0x2c] sm:$0xf]
        %v291 = vld [vmem:[%s2] sm:$0xff]
        %v292 = vld [vmem:[%s2 + $0x8] sm:$0xff]
        %v293 = vld [vmem:[%s2 + $0x10] sm:$0xff]
        %v294 = vld [vmem:[%s2 + $0x18] sm:$0xff]
        %v295 = vld [vmem:[%s2 + $0x20] sm:$0xff]
        %v296 = vld [vmem:[%s2 + $0x28] sm:$0xff]
        %v297 = vld [vmem:[%s2 + $0x30] sm:$0xff]
        %v298 = vld [vmem:[%s2 + $0x38] sm:$0xff]
        %v299 = vld [vmem:[%s2 + $0x40] sm:$0xff]
        %v300 = vld [vmem:[%s2 + $0x48] sm:$0xff]
        %v301 = vld [vmem:[%s2 + $0x50] sm:$0xff]
        %v302 = vld [vmem:[%s2 + $0x58] sm:$0xff]
        %v303 = vld [vmem:[%s248] sm:$0xff]
        %v304 = vld [vmem:[%s248 + $0x8] sm:$0x11]
        %v305 = vld [vmem:[#allocation2] sm:$0xff]
        %v306 = vld [vmem:[#allocation2 + $0x8] sm:$0xff]
        %v307 = vld [vmem:[#allocation2 + $0x10] sm:$0xff]
        %v308 = vld [vmem:[#allocation2 + $0x18] sm:$0xff]
        %v309 = vld [vmem:[#allocation2 + $0x20] sm:$0xff]
        %v310 = vld [vmem:[#allocation2 + $0x28] sm:$0xff]
        %v311 = vld [vmem:[#allocation2 + $0x30] sm:$0xff]
        %v312 = vld [vmem:[#allocation2 + $0x38] sm:$0xff]
        %v313 = vld [vmem:[#allocation2 + $0x40] sm:$0xff]
        %v314 = vld [vmem:[#allocation2 + $0x48] sm:$0xff]
        %v315 = vld [vmem:[#allocation2 + $0x50] sm:$0xff]
        %v316 = vld [vmem:[#allocation2 + $0x58] sm:$0xff]
        %v317 = vld [vmem:[#allocation2 + $0x60] sm:$0xff]
        %v318 = vld [vmem:[#allocation2 + $0x68] sm:$0xff]
        %v319 = vld [vmem:[#allocation2 + $0x70] sm:$0xff]
        %v320 = vld [vmem:[#allocation2 + $0x78] sm:$0xff]
        %v321 = vld [vmem:[#allocation2 + $0x80] sm:$0xff]
        %v322 = vld [vmem:[#allocation2 + $0x88] sm:$0xff]
        %v323 = vld [vmem:[#allocation2 + $0x90] sm:$0xff]
        %v324 = vld [vmem:[#allocation2 + $0x98] sm:$0xff]
        %v325 = vld [vmem:[#allocation2 + $0xa0] sm:$0xff]
        %v326 = vld [vmem:[#allocation2 + $0xa8] sm:$0xff]
        %v327 = vld [vmem:[#allocation2 + $0xb0] sm:$0xff]
        %v328 = vld [vmem:[#allocation2 + $0xb8] sm:$0xff]
        %330 = vset.pattern.permute.xlu0 0
        %331 = vperm.xlu0 %330, %v291
        %v332 = vpop.permute.xlu0 %331
        %335 = vset.pattern.permute.xlu0 0
        %336 = vperm.xlu0 %335, %v292
        %v337 = vpop.permute.xlu0 %336
        %340 = vset.pattern.permute.xlu0 0
        %341 = vperm.xlu0 %340, %v293
        %v342 = vpop.permute.xlu0 %341
        %345 = vset.pattern.permute.xlu0 0
        %346 = vperm.xlu0 %345, %v294
        %v347 = vpop.permute.xlu0 %346
        %350 = vset.pattern.permute.xlu0 0
        %351 = vperm.xlu0 %350, %v295
        %v352 = vpop.permute.xlu0 %351
        %355 = vset.pattern.permute.xlu0 0
        %356 = vperm.xlu0 %355, %v296
        %v357 = vpop.permute.xlu0 %356
        %360 = vset.pattern.permute.xlu0 0
        %361 = vperm.xlu0 %360, %v297
        %v362 = vpop.permute.xlu0 %361
        %365 = vset.pattern.permute.xlu0 0
        %366 = vperm.xlu0 %365, %v298
        %v367 = vpop.permute.xlu0 %366
        %370 = vset.pattern.permute.xlu0 0
        %371 = vperm.xlu0 %370, %v299
        %v372 = vpop.permute.xlu0 %371
        %375 = vset.pattern.permute.xlu0 0
        %376 = vperm.xlu0 %375, %v300
        %v377 = vpop.permute.xlu0 %376
        %380 = vset.pattern.permute.xlu0 0
        %381 = vperm.xlu0 %380, %v301
        %v382 = vpop.permute.xlu0 %381
        %385 = vset.pattern.permute.xlu0 0
        %386 = vperm.xlu0 %385, %v302
        %v387 = vpop.permute.xlu0 %386
        %v401 = vunpack.c.l.b16 %v279
        %v402 = vunpack.c.l.b16 %v280
        %v403 = vunpack.c.l.b16 %v281
        %v404 = vunpack.c.l.b16 %v282
        %v405 = vunpack.c.l.b16 %v283
        %v406 = vunpack.c.l.b16 %v284
        %v407 = vunpack.c.l.b16 %v285
        %v408 = vunpack.c.l.b16 %v286
        %v409 = vunpack.c.l.b16 %v287
        %v410 = vunpack.c.l.b16 %v288
        %v411 = vunpack.c.l.b16 %v289
        %v412 = vunpack.c.l.b16 %v290
        %v413 = vpack.c.b16 %v402, %v401
        %v414 = vpack.c.b16 %v404, %v403
        %v415 = vpack.c.b16 %v406, %v405
        %v416 = vpack.c.b16 %v408, %v407
        %v417 = vpack.c.b16 %v410, %v409
        %v418 = vpack.c.b16 %v412, %v411
        %v421 = vunpack.c.l.b16 %v303
        %v422 = vunpack.c.h.b16 %v303
        %v423 = vunpack.c.l.b16 %v304
        %v424 = vunpack.c.h.b16 %v304
        %v425 = vpack.c.b16 %v423, %v421
        %v426 = vpack.c.b16 %v424, %v422
        %vm427 = vcmask 72704
        %v429 = vsel %vm427, %v413, 0
        %v432 = vsel %vm427, %v414, 0
        %v435 = vsel %vm427, %v415, 0
        %v438 = vsel %vm427, %v416, 0
        %v441 = vsel %vm427, %v417, 0
        %v444 = vsel %vm427, %v418, 0
        %vm446 = vcmask 1043456
        %vm447 = vcmask 1044480
        %v448 = vsel %vm446, 4294967295, 65535
        %v449 = vsel %vm447, %v448, 0
        %v451 = vand.u32 %v425, %v449
        %v454 = vand.u32 %v426, %v449
        %456 = vmatprep.subr.bf16.mxu0 0
        %457 = vmatpush1.bf16.msra.mxu0 0
        %458 = vmatprep.subr.bf16.mxu0 0
        %459 = vmatpush1.bf16.msra.mxu0 0
        %460 = vmatprep.subr.bf16.mxu0 0
        %461 = vmatpush1.bf16.msra.mxu0 0
        %462 = vmatprep.subr.bf16.mxu0 0
        %463 = vmatpush1.bf16.msra.mxu0 0
        %464 = vmatprep.subr.bf16.mxu0 0
        %465 = vmatpush1.bf16.msra.mxu0 0
        %466 = vmatprep.subr.bf16.mxu0 0
        %467 = vmatpush1.bf16.msra.mxu0 0
        %468 = vmatprep.subr.bf16.mxu0 0
        %469 = vmatpush1.bf16.msra.mxu0 0
        %470 = vmatprep.subr.bf16.mxu0 %v454
        %471 = vmatpush1.bf16.msra.mxu0 %v451
        %472 = vmatprep.subr.bf16.mxu0 0
        %473 = vmatpush2.bf16.msra.mxu0 0
        %474 = vmatprep.subr.bf16.mxu0 0
        %475 = vmatpush2.bf16.msra.mxu0 0
        %476 = vmatprep.subr.bf16.mxu0 0
        %477 = vmatpush2.bf16.msra.mxu0 0
        %478 = vmatprep.subr.bf16.mxu0 0
        %479 = vmatpush2.bf16.msra.mxu0 0
        %480 = vmatprep.subr.bf16.mxu0 0
        %481 = vmatpush2.bf16.msra.mxu0 0
        %482 = vmatprep.subr.bf16.mxu0 0
        %483 = vmatpush2.bf16.msra.mxu0 0
        %484 = vmatprep.subr.bf16.mxu0 0
        %485 = vmatpush2.bf16.msra.mxu0 0
        %486 = vmatprep.subr.bf16.mxu0 0
        %487 = vmatpush2.bf16.msra.mxu0 0
        %488 = vmatprep.mubr.bf16.mxu0 0
        %489 = vmatmul.mubr.bf16.gmra.mxu0 %v429
        %v490 = vpop.f32.mrf.mxu0
        %v491 = vadd.f32 %v332, %v490
        %v492 = vpop.f32.mrf.mxu0
        %v493 = vadd.f32 %v332, %v492
        %v494 = vpop.f32.mrf.mxu0
        %v495 = vadd.f32 %v337, %v494
        %v496 = vpop.f32.mrf.mxu0
        %v497 = vadd.f32 %v337, %v496
        %498 = vmatprep.mubr.bf16.mxu0 0
        %499 = vmatmul.mubr.bf16.gmra.mxu0 %v432
        %v500 = vpop.f32.mrf.mxu0
        %v501 = vadd.f32 %v342, %v500
        %v502 = vpop.f32.mrf.mxu0
        %v503 = vadd.f32 %v342, %v502
        %v504 = vpop.f32.mrf.mxu0
        %v505 = vadd.f32 %v347, %v504
        %v506 = vpop.f32.mrf.mxu0
        %v507 = vadd.f32 %v347, %v506
        %508 = vmatprep.mubr.bf16.mxu0 0
        %509 = vmatmul.mubr.bf16.gmra.mxu0 %v435
        %v510 = vpop.f32.mrf.mxu0
        %v511 = vadd.f32 %v352, %v510
        %v512 = vpop.f32.mrf.mxu0
        %v513 = vadd.f32 %v352, %v512
        %v514 = vpop.f32.mrf.mxu0
        %v515 = vadd.f32 %v357, %v514
        %v516 = vpop.f32.mrf.mxu0
        %v517 = vadd.f32 %v357, %v516
        %518 = vmatprep.mubr.bf16.mxu0 0
        %519 = vmatmul.mubr.bf16.gmra.mxu0 %v438
        %v520 = vpop.f32.mrf.mxu0
        %v521 = vadd.f32 %v362, %v520
        %v522 = vpop.f32.mrf.mxu0
        %v523 = vadd.f32 %v362, %v522
        %v524 = vpop.f32.mrf.mxu0
        %v525 = vadd.f32 %v367, %v524
        %v526 = vpop.f32.mrf.mxu0
        %v527 = vadd.f32 %v367, %v526
        %528 = vmatprep.mubr.bf16.mxu0 0
        %529 = vmatmul.mubr.bf16.gmra.mxu0 %v441
        %v530 = vpop.f32.mrf.mxu0
        %v531 = vadd.f32 %v372, %v530
        %v532 = vpop.f32.mrf.mxu0
        %v533 = vadd.f32 %v372, %v532
        %v534 = vpop.f32.mrf.mxu0
        %v535 = vadd.f32 %v377, %v534
        %v536 = vpop.f32.mrf.mxu0
        %v537 = vadd.f32 %v377, %v536
        %538 = vmatprep.mubr.bf16.mxu0 0
        %539 = vmatmul.mubr.bf16.gmra.mxu0 %v444
        %v540 = vpop.f32.mrf.mxu0
        %v541 = vadd.f32 %v382, %v540
        %v542 = vpop.f32.mrf.mxu0
        %v543 = vadd.f32 %v382, %v542
        %v544 = vpop.f32.mrf.mxu0
        %v545 = vadd.f32 %v387, %v544
        %v546 = vpop.f32.mrf.mxu0
        %v547 = vadd.f32 %v387, %v546
        %548 = vdwg.mxu0
        %v549 = vmax.f32 %v491, 0.0
        %v550 = vmax.f32 %v493, 0.0
        %v551 = vmax.f32 %v495, 0.0
        %v552 = vmax.f32 %v497, 0.0
        %v553 = vmax.f32 %v501, 0.0
        %v554 = vmax.f32 %v503, 0.0
        %v555 = vmax.f32 %v505, 0.0
        %v556 = vmax.f32 %v507, 0.0
        %v557 = vmax.f32 %v511, 0.0
        %v558 = vmax.f32 %v513, 0.0
        %v559 = vmax.f32 %v515, 0.0
        %v560 = vmax.f32 %v517, 0.0
        %v561 = vmax.f32 %v521, 0.0
        %v562 = vmax.f32 %v523, 0.0
        %v563 = vmax.f32 %v525, 0.0
        %v564 = vmax.f32 %v527, 0.0
        %v565 = vmax.f32 %v531, 0.0
        %v566 = vmax.f32 %v533, 0.0
        %v567 = vmax.f32 %v535, 0.0
        %v568 = vmax.f32 %v537, 0.0
        %v569 = vmax.f32 %v541, 0.0
        %v570 = vmax.f32 %v543, 0.0
        %v571 = vmax.f32 %v545, 0.0
        %v572 = vmax.f32 %v547, 0.0
        %v573 = vadd.f32 %v305, %v549
        %v574 = vadd.f32 %v306, %v550
        %v575 = vadd.f32 %v307, %v551
        %v576 = vadd.f32 %v308, %v552
        %v577 = vadd.f32 %v309, %v553
        %v578 = vadd.f32 %v310, %v554
        %v579 = vadd.f32 %v311, %v555
        %v580 = vadd.f32 %v312, %v556
        %v581 = vadd.f32 %v313, %v557
        %v582 = vadd.f32 %v314, %v558
        %v583 = vadd.f32 %v315, %v559
        %v584 = vadd.f32 %v316, %v560
        %v585 = vadd.f32 %v317, %v561
        %v586 = vadd.f32 %v318, %v562
        %v587 = vadd.f32 %v319, %v563
        %v588 = vadd.f32 %v320, %v564
        %v589 = vadd.f32 %v321, %v565
        %v590 = vadd.f32 %v322, %v566
        %v591 = vadd.f32 %v323, %v567
        %v592 = vadd.f32 %v324, %v568
        %v593 = vadd.f32 %v325, %v569
        %v594 = vadd.f32 %v326, %v570
        %v595 = vadd.f32 %v327, %v571
        %v596 = vadd.f32 %v328, %v572
        %597 = vst [vmem:[#allocation2] sm:$0xff] %v573
        %598 = vst [vmem:[#allocation2 + $0x8] sm:$0xff] %v574
        %599 = vst [vmem:[#allocation2 + $0x10] sm:$0xff] %v575
        %600 = vst [vmem:[#allocation2 + $0x18] sm:$0xff] %v576
        %601 = vst [vmem:[#allocation2 + $0x20] sm:$0xff] %v577
        %602 = vst [vmem:[#allocation2 + $0x28] sm:$0xff] %v578
        %603 = vst [vmem:[#allocation2 + $0x30] sm:$0xff] %v579
        %604 = vst [vmem:[#allocation2 + $0x38] sm:$0xff] %v580
        %605 = vst [vmem:[#allocation2 + $0x40] sm:$0xff] %v581
        %606 = vst [vmem:[#allocation2 + $0x48] sm:$0xff] %v582
        %607 = vst [vmem:[#allocation2 + $0x50] sm:$0xff] %v583
        %608 = vst [vmem:[#allocation2 + $0x58] sm:$0xff] %v584
        %609 = vst [vmem:[#allocation2 + $0x60] sm:$0xff] %v585
        %610 = vst [vmem:[#allocation2 + $0x68] sm:$0xff] %v586
        %611 = vst [vmem:[#allocation2 + $0x70] sm:$0xff] %v587
        %612 = vst [vmem:[#allocation2 + $0x78] sm:$0xff] %v588
        %613 = vst [vmem:[#allocation2 + $0x80] sm:$0xff] %v589
        %614 = vst [vmem:[#allocation2 + $0x88] sm:$0xff] %v590
        %615 = vst [vmem:[#allocation2 + $0x90] sm:$0xff] %v591
        %616 = vst [vmem:[#allocation2 + $0x98] sm:$0xff] %v592
        %617 = vst [vmem:[#allocation2 + $0xa0] sm:$0xff] %v593
        %618 = vst [vmem:[#allocation2 + $0xa8] sm:$0xff] %v594
        %619 = vst [vmem:[#allocation2 + $0xb0] sm:$0xff] %v595
        %620 = vst [vmem:[#allocation2 + $0xb8] sm:$0xff] %v596
        // Predicated region
        $region45: #{tpu_custom_call.1} parent=39 // pred_check
          %p621 = pneg %p251
        $region46: #{tpu_custom_call.1} parent=39 // pred_check_branch
          %623 = sbr.rel (%p621) target = $region48
        $region47: #{tpu_custom_call.1} parent=39 // pred_region
          %v624 = vld [vmem:[#allocation2] sm:$0xff]
          %v625 = vld [vmem:[#allocation2 + $0x8] sm:$0xff]
          %v626 = vld [vmem:[#allocation2 + $0x10] sm:$0xff]
          %v627 = vld [vmem:[#allocation2 + $0x18] sm:$0xff]
          %v628 = vld [vmem:[#allocation2 + $0x20] sm:$0xff]
          %v629 = vld [vmem:[#allocation2 + $0x28] sm:$0xff]
          %v630 = vld [vmem:[#allocation2 + $0x30] sm:$0xff]
          %v631 = vld [vmem:[#allocation2 + $0x38] sm:$0xff]
          %v632 = vld [vmem:[#allocation2 + $0x40] sm:$0xff]
          %v633 = vld [vmem:[#allocation2 + $0x48] sm:$0xff]
          %v634 = vld [vmem:[#allocation2 + $0x50] sm:$0xff]
          %v635 = vld [vmem:[#allocation2 + $0x58] sm:$0xff]
          %v636 = vld [vmem:[#allocation2 + $0x60] sm:$0xff]
          %v637 = vld [vmem:[#allocation2 + $0x68] sm:$0xff]
          %v638 = vld [vmem:[#allocation2 + $0x70] sm:$0xff]
          %v639 = vld [vmem:[#allocation2 + $0x78] sm:$0xff]
          %v640 = vld [vmem:[#allocation2 + $0x80] sm:$0xff]
          %v641 = vld [vmem:[#allocation2 + $0x88] sm:$0xff]
          %v642 = vld [vmem:[#allocation2 + $0x90] sm:$0xff]
          %v643 = vld [vmem:[#allocation2 + $0x98] sm:$0xff]
          %v644 = vld [vmem:[#allocation2 + $0xa0] sm:$0xff]
          %v645 = vld [vmem:[#allocation2 + $0xa8] sm:$0xff]
          %v646 = vld [vmem:[#allocation2 + $0xb0] sm:$0xff]
          %v647 = vld [vmem:[#allocation2 + $0xb8] sm:$0xff]
          %v648 = vadd.f32 %v624, %v625
          %649 = vadd.xlane.f32.xlu0 %v648
          %v650 = vpop.xlane.xlu0 %649
          %v651 = vadd.f32 %v626, %v627
          %652 = vadd.xlane.f32.xlu0 %v651
          %v653 = vpop.xlane.xlu0 %652
          %v654 = vadd.f32 %v628, %v629
          %655 = vadd.xlane.f32.xlu0 %v654
          %v656 = vpop.xlane.xlu0 %655
          %v657 = vadd.f32 %v630, %v631
          %658 = vadd.xlane.f32.xlu0 %v657
          %v659 = vpop.xlane.xlu0 %658
          %v660 = vadd.f32 %v632, %v633
          %661 = vadd.xlane.f32.xlu0 %v660
          %v662 = vpop.xlane.xlu0 %661
          %v663 = vadd.f32 %v634, %v635
          %664 = vadd.xlane.f32.xlu0 %v663
          %v665 = vpop.xlane.xlu0 %664
          %v666 = vadd.f32 %v636, %v637
          %667 = vadd.xlane.f32.xlu0 %v666
          %v668 = vpop.xlane.xlu0 %667
          %v669 = vadd.f32 %v638, %v639
          %670 = vadd.xlane.f32.xlu0 %v669
          %v671 = vpop.xlane.xlu0 %670
          %v672 = vadd.f32 %v640, %v641
          %673 = vadd.xlane.f32.xlu0 %v672
          %v674 = vpop.xlane.xlu0 %673
          %v675 = vadd.f32 %v642, %v643
          %676 = vadd.xlane.f32.xlu0 %v675
          %v677 = vpop.xlane.xlu0 %676
          %v678 = vadd.f32 %v644, %v645
          %679 = vadd.xlane.f32.xlu0 %v678
          %v680 = vpop.xlane.xlu0 %679
          %v681 = vadd.f32 %v646, %v647
          %682 = vadd.xlane.f32.xlu0 %v681
          %v683 = vpop.xlane.xlu0 %682
          %v684 = vmul.f32 %v650, 0.00390625
          %v685 = vmul.f32 %v653, 0.00390625
          %v686 = vmul.f32 %v656, 0.00390625
          %v687 = vmul.f32 %v659, 0.00390625
          %v688 = vmul.f32 %v662, 0.00390625
          %v689 = vmul.f32 %v665, 0.00390625
          %v690 = vmul.f32 %v668, 0.00390625
          %v691 = vmul.f32 %v671, 0.00390625
          %v692 = vmul.f32 %v674, 0.00390625
          %v693 = vmul.f32 %v677, 0.00390625
          %v694 = vmul.f32 %v680, 0.00390625
          %v695 = vmul.f32 %v683, 0.00390625
          %v696 = vmax.f32 %v684, %v688
          %v697 = vmax.f32 %v685, %v689
          %v698 = vmax.f32 %v686, %v690
          %v699 = vmax.f32 %v687, %v691
          %v700 = vmax.f32 %v696, %v692
          %v701 = vmax.f32 %v697, %v693
          %v702 = vmax.f32 %v698, %v694
          %v703 = vmax.f32 %v699, %v695
          %v704 = vld [vmem:[%s3] sm:$0xff]
          %v705 = vld [vmem:[%s3 + $0x8] sm:$0xff]
          %v706 = vld [vmem:[%s3 + $0x10] sm:$0xff]
          %v707 = vld [vmem:[%s3 + $0x18] sm:$0xff]
          %v708 = vmul.f32 %v700, %v704
          %v709 = vmul.f32 %v701, %v705
          %v710 = vmul.f32 %v702, %v706
          %v711 = vmul.f32 %v703, %v707
          %vm712 = vcmask 15360
          %v713 = vsel %vm712, %v708, 0.0
          %v714 = vsel %vm712, %v709, 0.0
          %v715 = vadd.f32 %v713, %v714
          %v716 = vsel %vm712, %v710, 0.0
          %v717 = vadd.f32 %v715, %v716
          %v718 = vsel %vm712, %v711, 0.0
          %v719 = vadd.f32 %v717, %v718
          %v720 = vrot.slane %v719, 4
          %v721 = vadd.f32 %v719, %v720
          %v722 = vrot.slane %v721, 2
          %v723 = vadd.f32 %v721, %v722
          %v724 = vrot.slane %v723, 1
          %v725 = vadd.f32 %v723, %v724
          %v726 = vld [vmem:[%s4] sm:$0x1]
          %v727 = vadd.f32 %v725, %v726
          %vm728 = vcmask 8192
          %729 = vst.msk [vmem:[%s239] sm:$0x1] %vm728, %v727
        $region48: #{tpu_custom_call.1} parent=39 // pred_fallthru
          _
        %s730 = sand.u32 %s151, 1
        %s731 = scalar_lea.sflag [#allocation4], %s730
        %s732 = sand.u32 %s151, 1
        %s733 = scalar_lea.vmem [#allocation3], %s732
        // Predicated region
        $region49: #{tpu_custom_call.1} parent=39 // pred_check
          %p734 = pneg %p161
        $region50: #{tpu_custom_call.1} parent=39 // pred_check_branch
          %736 = sbr.rel (%p734) target = $region52
        $region51: #{tpu_custom_call.1} parent=39 // pred_region
          %s738 = ssub.s32 16, 16
          %739 = vsyncadd %s731, %s738
          %s740 = smul.addr %s23, 16
          %s741 = scalar_lea.hbm %s5, %s740
          %s743 = sshll.u32 %s733, 4
          %s744 = int_to_ptr.vmem [resolvable:$true] %s743
          %746 = dma.vmem_to_hbm [thread:$0]  %s744, 16, %s741, %s731
        $region52: #{tpu_custom_call.1} parent=39 // pred_fallthru
          _
      $region40: #{tpu_custom_call.1} parent=5 // pred_fallthru
        _
      %p747 = scmp.le.s32.totalorder 2, %s14
      // Predicated region
      $region53: #{tpu_custom_call.1} parent=5 // pred_check
        %p748 = pneg %p747
      $region54: #{tpu_custom_call.1} parent=5 // pred_check_branch
        %750 = sbr.rel (%p748) target = $region56
      $region55: #{tpu_custom_call.1} parent=5 // pred_region
        %s751 = ssub.s32 %s14, 2
        // Predicated region
        $region57: #{tpu_custom_call.1} parent=55 // pred_check
          %p752 = pneg %p167
        $region58: #{tpu_custom_call.1} parent=55 // pred_check_branch
          %754 = sbr.rel (%p752) target = $region60
        $region59: #{tpu_custom_call.1} parent=55 // pred_region
          %s755 = sand.u32 %s152, 1
          %s756 = scalar_lea.sflag [#allocation4], %s755
          %s757 = sand.u32 %s152, 1
          %s758 = scalar_lea.vmem [#allocation3], %s757
          %759 = dma.done %s756, 16
        $region60: #{tpu_custom_call.1} parent=55 // pred_fallthru
          _
      $region56: #{tpu_custom_call.1} parent=5 // pred_fallthru
        _
    $region6: #{tpu_custom_call.1} parent=1 // loop_footer
      %s18 = sadd.s32 1, %s14
    $region7: #{tpu_custom_call.1} parent=1 // loop_footer_branch
      %13 = sbr.rel target = $region3
    $region8: #{tpu_custom_call.1} parent=1 // loop_exit
      _
    %760 = vsyncpa [#allocation4], 1
    %s761 = scalar_lea.sflag [#allocation4], 1
    %762 = vsyncpa %s761, 1

</llo_original>
